<compile_context>
chip_gen: v7x
topology: tpu7x:2x2x1
jax: 0.10.0
libtpu: 0.0.40
codegen_flags: <defaults>
</compile_context>

<pallas_src>
import jax
import jax.numpy as jnp
import numpy as np
from jax.experimental import pallas as pl
from jax.experimental.pallas import tpu as pltpu


def prompt_cls_kernel(x_ref, wenc_ref, benc_ref, wfold_ref, out_ref):
    # x_ref:     (TM, H)      <mask>-position hidden inputs for this row tile
    # wenc_ref:  (H, H)       tiny "PLM body"
    # benc_ref:  (1, H)
    # wfold_ref: (H, C_pad)   folded LM-head @ verbalizer projection
    # out_ref:   (TM, C_pad)  label-word logits (lane-dense, padded C)
    h = jnp.tanh(
        jnp.dot(x_ref[...], wenc_ref[...], preferred_element_type=jnp.float32)
        + benc_ref[...]                                   # (1, H) broadcasts over rows
    )
    out_ref[...] = jnp.dot(h, wfold_ref[...], preferred_element_type=jnp.float32)


def prompt_for_classification(x_emb, loss_ids, w_enc, b_enc, w_lm, verb_proj):
    """x_emb: (B, S, H) embedded templated input, loss_ids: (B, S) float mask."""
    B, S, H = x_emb.shape
    V, C = verb_proj.shape

    # --- wrapper-side exact algebraic restructuring -------------------------
    # Fold LM head + verbalizer: (H, V) @ (V, C) -> (H, C).  Exact (linear).
    w_fold = jnp.dot(w_lm, verb_proj)

    # extract_at_mask BEFORE the matmuls: the synthetic PLM is position-wise,
    # so only the <mask> row ever matters.  (B, S, H) -> (B, H).
    mask_pos = jnp.argmax(loss_ids, axis=1)                              # (B,)
    x_mask = jnp.take_along_axis(x_emb, mask_pos[:, None, None], axis=1)[:, 0, :]

    # --- padding for MXU / lane-dense stores --------------------------------
    C_pad = ((C + 127) // 128) * 128                      # lane-dense output
    TM = 256 if B >= 256 else ((B + 7) // 8) * 8          # row tile (sublane/MXU aligned)
    B_pad = ((B + TM - 1) // TM) * TM
    x_p = jnp.pad(x_mask, ((0, B_pad - B), (0, 0)))
    w_fold_p = jnp.pad(w_fold, ((0, 0), (0, C_pad - C)))
    # TODO(synk): at realistic H cast activations/weights to bf16 (f32 tanh on v5e)
    # and tile (H, H) over a K grid axis if it no longer fits VMEM.

    out = pl.pallas_call(
        prompt_cls_kernel,
        out_shape=jax.ShapeDtypeStruct((B_pad, C_pad), jnp.float32),
        grid_spec=pltpu.PrefetchScalarGridSpec(
            num_scalar_prefetch=0,
            grid=(B_pad // TM,),
            in_specs=[
                pl.BlockSpec((TM, H), lambda i: (i, 0)),
                pl.BlockSpec((H, H), lambda i: (0, 0)),
                pl.BlockSpec((1, H), lambda i: (0, 0)),
                pl.BlockSpec((H, C_pad), lambda i: (0, 0)),
            ],
            out_specs=pl.BlockSpec((TM, C_pad), lambda i: (i, 0)),
        ),
        compiler_params=pltpu.CompilerParams(dimension_semantics=("parallel",)),
    )(x_p, w_enc, b_enc, w_fold_p)

    return out[:B, :C]


if __name__ == "__main__":
    # Small, shape-consistent synthetic setup.
    B, S, H, V, C = 2, 8, 32, 128, 2

    key = jax.random.PRNGKey(0)
    k_emb, k_enc, k_benc, k_lm, k_ids = jax.random.split(key, 5)

    # Deterministic synthetic parameters (no checkpoint load).
    emb_table = jax.random.normal(k_emb, (V, H), jnp.float32) * 0.1   # PLM embeddings
    w_enc = jax.random.normal(k_enc, (H, H), jnp.float32) * 0.1       # PLM body
    b_enc = jax.random.normal(k_benc, (1, H), jnp.float32) * 0.1
    w_lm = jax.random.normal(k_lm, (H, V), jnp.float32) * 0.1         # LM head

    # Verbalizer: label words per class -> normalized one-hot projection (V, C)
    label_word_ids = {0: [3, 7, 11], 1: [5, 9]}
    verb_np = np.zeros((V, C), dtype=np.float32)
    for c, ids in label_word_ids.items():
        for tok in ids:
            verb_np[tok, c] = 1.0 / len(ids)
    verb_proj = jnp.asarray(verb_np)
    # TODO(synk): ManualVerbalizer calibration / log-softmax normalization not modeled
    # (the head/verbalizer fold relies on the projection staying linear).

    # Templated batch: input_ids + loss_ids (exactly one <mask> position per example).
    input_ids = jax.random.randint(k_ids, (B, S), 0, V)
    loss_np = np.zeros((B, S), dtype=np.float32)
    loss_np[:, 4] = 1.0                                               # <mask> at position 4
    loss_ids = jnp.asarray(loss_np)

    # Glue: embedding lookup in plain JAX.
    x_emb = jnp.take(emb_table, input_ids, axis=0)                    # (B, S, H)

    out = prompt_for_classification(x_emb, loss_ids, w_enc, b_enc, w_lm, verb_proj)
    out = jax.block_until_ready(out)

    # Pure-JAX reference following the ORIGINAL (unfolded) forward path.
    h_ref = jnp.tanh(jnp.einsum("bsh,hk->bsk", x_emb, w_enc) + b_enc[None])
    logits_ref = jnp.einsum("bsh,hv->bsv", h_ref, w_lm)               # (B, S, V)
    masked_ref = jnp.sum(logits_ref * loss_ids[..., None], axis=1)    # extract_at_mask
    ref = masked_ref @ verb_proj                                      # verbalizer
    np.testing.assert_allclose(np.asarray(out), np.asarray(ref), rtol=1e-4, atol=1e-4)

    assert out.shape == (B, C)
    print("KERNEL_OK")
</pallas_src>

<mosaic_0001>
module attributes {stable_mosaic.version = 11 : i64} {
  func.func @prompt_cls_kernel(%arg0: i32, %arg1: memref<8x32xf32, #tpu.memory_space<vmem>>, %arg2: memref<32x32xf32, #tpu.memory_space<vmem>>, %arg3: memref<1x32xf32, #tpu.memory_space<vmem>>, %arg4: memref<32x128xf32, #tpu.memory_space<vmem>>, %arg5: memref<8x128xf32, #tpu.memory_space<vmem>>) attributes {dimension_semantics = [#tpu.dimension_semantics<parallel>], iteration_bounds = array<i64: 1>, scalar_prefetch = 0 : i64, scratch_operands = 0 : i64, tpu.core_type = #tpu.core_type<tc>, window_params = [{transform_indices = @transform_0, window_bounds = array<i64: 8, 32>}, {pipeline_mode = #tpu.pipeline_mode<synchronous>, transform_indices = @transform_1, window_bounds = array<i64: 32, 32>}, {pipeline_mode = #tpu.pipeline_mode<synchronous>, transform_indices = @transform_2, window_bounds = array<i64: 1, 32>}, {pipeline_mode = #tpu.pipeline_mode<synchronous>, transform_indices = @transform_3, window_bounds = array<i64: 32, 128>}, {transform_indices = @transform_4, window_bounds = array<i64: 8, 128>}]} {
    %c0 = arith.constant 0 : index
    %c0_0 = arith.constant 0 : index
    %0 = vector.load %arg1[%c0, %c0_0] : memref<8x32xf32, #tpu.memory_space<vmem>>, vector<8x32xf32>
    %c0_1 = arith.constant 0 : index
    %c0_2 = arith.constant 0 : index
    %1 = vector.load %arg2[%c0_1, %c0_2] : memref<32x32xf32, #tpu.memory_space<vmem>>, vector<32x32xf32>
    %cst = arith.constant dense<0.000000e+00> : vector<8x32xf32>
    %2 = tpu.matmul %0, %1, %cst {dimension_numbers = #tpu.dot_dimension_numbers<[1], [0], [0], [1], [0, 0, 1, 1], [], []>} : vector<8x32xf32>, vector<32x32xf32>, vector<8x32xf32> -> vector<8x32xf32>
    %c0_3 = arith.constant 0 : index
    %c0_4 = arith.constant 0 : index
    %3 = vector.load %arg3[%c0_3, %c0_4] : memref<1x32xf32, #tpu.memory_space<vmem>>, vector<1x32xf32>
    %4 = vector.broadcast %3 : vector<1x32xf32> to vector<8x32xf32>
    %5 = arith.addf %2, %4 : vector<8x32xf32>
    %6 = math.tanh %5 : vector<8x32xf32>
    %c0_5 = arith.constant 0 : index
    %c0_6 = arith.constant 0 : index
    %7 = vector.load %arg4[%c0_5, %c0_6] : memref<32x128xf32, #tpu.memory_space<vmem>>, vector<32x128xf32>
    %cst_7 = arith.constant dense<0.000000e+00> : vector<8x128xf32>
    %8 = tpu.matmul %6, %7, %cst_7 {dimension_numbers = #tpu.dot_dimension_numbers<[1], [0], [0], [1], [0, 0, 1, 1], [], []>} : vector<8x32xf32>, vector<32x128xf32>, vector<8x128xf32> -> vector<8x128xf32>
    %c0_8 = arith.constant 0 : index
    %c0_9 = arith.constant 0 : index
    %9 = vector.load %arg5[%c0_8, %c0_9] : memref<8x128xf32, #tpu.memory_space<vmem>>, vector<8x128xf32>
    tpu.vector_store %arg5[%c0_8, %c0_9], %8 {strides = array<i32>} : memref<8x128xf32, #tpu.memory_space<vmem>>, vector<8x128xf32>,
    return
  }
  func.func @transform_0(%arg0: i32) -> (i32, i32) {
    %c0_i32 = arith.constant 0 : i32
    %c0_i32_0 = arith.constant 0 : i32
    return %arg0, %c0_i32 : i32, i32
  }
  func.func @transform_1(%arg0: i32) -> (i32, i32) {
    %c0_i32 = arith.constant 0 : i32
    %c0_i32_0 = arith.constant 0 : i32
    %c0_i32_1 = arith.constant 0 : i32
    return %c0_i32, %c0_i32_0 : i32, i32
  }
  func.func @transform_2(%arg0: i32) -> (i32, i32) {
    %c0_i32 = arith.constant 0 : i32
    %c0_i32_0 = arith.constant 0 : i32
    %c0_i32_1 = arith.constant 0 : i32
    return %c0_i32, %c0_i32_0 : i32, i32
  }
  func.func @transform_3(%arg0: i32) -> (i32, i32) {
    %c0_i32 = arith.constant 0 : i32
    %c0_i32_0 = arith.constant 0 : i32
    %c0_i32_1 = arith.constant 0 : i32
    return %c0_i32, %c0_i32_0 : i32, i32
  }
  func.func @transform_4(%arg0: i32) -> (i32, i32) {
    %c0_i32 = arith.constant 0 : i32
    %c0_i32_0 = arith.constant 0 : i32
    return %arg0, %c0_i32 : i32, i32
  }
}

</mosaic_0001>

<llo_original>
// kernel: tpu_custom_call.1
$region0: #{tpu_custom_call.1}
  #allocation0 [shape = 'u32[]', space=smem, size = 0x4, offset = 0x4, fixed_abs, tag = 'smem constant byte address 0x4 - core index']
  #allocation1 [shape = 'u32[144,128]{1,0:T(1,128)}', space=vmem, size = 0x12000, scoped, tag = 'internal scratch']
  %s0 = inlined_call_operand.hbm [shape: f32[8,32], index: 0, kind: input, shape index: {}]
  %s1 = inlined_call_operand.hbm [shape: f32[32,32], index: 1, kind: input, shape index: {}]
  %s2 = inlined_call_operand.vmem [shape: f32[1,32], index: 2, kind: input, shape index: {}]
  %s3 = inlined_call_operand.hbm [shape: f32[32,128], index: 3, kind: input, shape index: {}]
  %s4 = inlined_call_operand.hbm [shape: f32[8,128], index: 4, kind: output, shape index: {}]
  %s5 = sld [smem:[#allocation0]]
  $region38: #{tpu_custom_call.1} parent=0
    _
  %s7 = ssub.s32 1, %s5
  %s8 = scalar_select 0, %s7, %s5
  $region1: #{tpu_custom_call.1} parent=0
    #allocation2 [shape = 'u8[4096]{0}', space=vmem, size = 0x1000, scoped, tag = 'input window, operand 0, single buffered']
    #allocation3 [shape = 's32[1]{0}', space=sflag, size = 0x4, scoped, tag = 'scoped memory for tpu_custom_call.1']
    #allocation4 [shape = 's32[1]{0}', space=sflag, size = 0x4, scoped, tag = 'scoped memory for tpu_custom_call.1']
    #allocation5 [shape = 'u8[16384]{0}', space=vmem, size = 0x4000, scoped, tag = 'input window, operand 1, single buffered']
    #allocation6 [shape = 's32[1]{0}', space=sflag, size = 0x4, scoped, tag = 'scoped memory for tpu_custom_call.1']
    #allocation7 [shape = 'u8[16384]{0}', space=vmem, size = 0x4000, scoped, tag = 'input window, operand 3, single buffered']
    #allocation8 [shape = 'u8[4096]{0}', space=vmem, size = 0x1000, scoped, tag = 'output window, operand 0, single buffered']
    %9 = vsyncpa [#allocation3], 0
    %10 = vsyncpa [#allocation6], 0
    %11 = vsyncpa [#allocation4], 0
    // Predicated region
    $region2: #{tpu_custom_call.1} parent=1 // pred_check
      _
    $region3: #{tpu_custom_call.1} parent=1 // pred_check_branch
      %13 = sbr.rel (0) target = $region5
    $region4: #{tpu_custom_call.1} parent=1 // pred_region
      %s15 = ssub.s32 128, 128
      %16 = vsyncadd [#allocation3], %s15
      %s18 = sshll.u32 [#allocation2], 4
      %s19 = int_to_ptr.vmem [resolvable:$true] %s18
      %21 = dma.hbm_to_vmem [thread:$0]  %s0, 128, %s19, [#allocation3]
    $region5: #{tpu_custom_call.1} parent=1 // pred_fallthru
      _
    // Predicated region
    $region6: #{tpu_custom_call.1} parent=1 // pred_check
      _
    $region7: #{tpu_custom_call.1} parent=1 // pred_check_branch
      %23 = sbr.rel (0) target = $region9
    $region8: #{tpu_custom_call.1} parent=1 // pred_region
      %s25 = ssub.s32 512, 512
      %26 = vsyncadd [#allocation6], %s25
      %s27 = sshll.u32 [#allocation5], 4
      %s28 = int_to_ptr.vmem [resolvable:$true] %s27
      %33 = dma.hbm_to_vmem [thread:$0]  %s1, 512, %s28, [#allocation6], 128, 128, 8
    $region9: #{tpu_custom_call.1} parent=1 // pred_fallthru
      _
    // Predicated region
    $region10: #{tpu_custom_call.1} parent=1 // pred_check
      _
    $region11: #{tpu_custom_call.1} parent=1 // pred_check_branch
      %35 = sbr.rel (0) target = $region13
    $region12: #{tpu_custom_call.1} parent=1 // pred_region
      _
    $region13: #{tpu_custom_call.1} parent=1 // pred_fallthru
      _
    // Predicated region
    $region14: #{tpu_custom_call.1} parent=1 // pred_check
      _
    $region15: #{tpu_custom_call.1} parent=1 // pred_check_branch
      %37 = sbr.rel (0) target = $region17
    $region16: #{tpu_custom_call.1} parent=1 // pred_region
      %s39 = ssub.s32 512, 512
      %40 = vsyncadd [#allocation6], %s39
      %s41 = sshll.u32 [#allocation7], 4
      %s42 = int_to_ptr.vmem [resolvable:$true] %s41
      %47 = dma.hbm_to_vmem [thread:$0]  %s3, 512, %s42, [#allocation6], 128, 128, 8
    $region17: #{tpu_custom_call.1} parent=1 // pred_fallthru
      _
    // Predicated region
    $region18: #{tpu_custom_call.1} parent=1 // pred_check
      _
    $region19: #{tpu_custom_call.1} parent=1 // pred_check_branch
      %49 = sbr.rel (0) target = $region21
    $region20: #{tpu_custom_call.1} parent=1 // pred_region
      %50 = dma.done [#allocation3], 128
    $region21: #{tpu_custom_call.1} parent=1 // pred_fallthru
      _
    // Predicated region
    $region22: #{tpu_custom_call.1} parent=1 // pred_check
      _
    $region23: #{tpu_custom_call.1} parent=1 // pred_check_branch
      %52 = sbr.rel (0) target = $region25
    $region24: #{tpu_custom_call.1} parent=1 // pred_region
      %53 = dma.done [#allocation6], 512
    $region25: #{tpu_custom_call.1} parent=1 // pred_fallthru
      _
    // Predicated region
    $region26: #{tpu_custom_call.1} parent=1 // pred_check
      _
    $region27: #{tpu_custom_call.1} parent=1 // pred_check_branch
      %55 = sbr.rel (0) target = $region29
    $region28: #{tpu_custom_call.1} parent=1 // pred_region
      %56 = dma.done [#allocation6], 512
    $region29: #{tpu_custom_call.1} parent=1 // pred_fallthru
      _
    %v57 = vld [vmem:[#allocation2] sm:$0xff]
    %v58 = vld [vmem:[#allocation5] sm:$0xff]
    %v59 = vld [vmem:[#allocation5 + $0x8] sm:$0xff]
    %v60 = vld [vmem:[#allocation5 + $0x10] sm:$0xff]
    %v61 = vld [vmem:[#allocation5 + $0x18] sm:$0xff]
    %v62 = vld [vmem:[%s2] sm:$0x1]
    %v64 = vlaneseq
    %v65 = vshrl.u32 %v64, 7
    %v66 = vsub.s32 0, %v65
    %v67 = vrot.slane %v62, %v66
    %vm69 = vcmask 261120
    %v71 = vsel %vm69, %v57, 0
    %73 = vmatprep.subr.mxu0 0.0
    %74 = vmatpush1.msra.mxu0 %v58
    %75 = vmatprep.subr.mxu0 0.0
    %76 = vmatpush1.msra.mxu0 %v59
    %77 = vmatprep.subr.mxu0 0.0
    %78 = vmatpush1.msra.mxu0 %v60
    %79 = vmatprep.subr.mxu0 0.0
    %80 = vmatpush1.msra.mxu0 %v61
    %81 = vmatprep.subr.mxu0 0.0
    %82 = vmatpush1.msra.mxu0 0.0
    %83 = vmatprep.subr.mxu0 0.0
    %84 = vmatpush1.msra.mxu0 0.0
    %85 = vmatprep.subr.mxu0 0.0
    %86 = vmatpush1.msra.mxu0 0.0
    %87 = vmatprep.subr.mxu0 0.0
    %88 = vmatpush1.msra.mxu0 0.0
    %89 = vmatprep.subr.mxu0 0.0
    %90 = vmatpush1.msra.mxu0 0.0
    %91 = vmatprep.subr.mxu0 0.0
    %92 = vmatpush1.msra.mxu0 0.0
    %93 = vmatprep.subr.mxu0 0.0
    %94 = vmatpush1.msra.mxu0 0.0
    %95 = vmatprep.subr.mxu0 0.0
    %96 = vmatpush1.msra.mxu0 0.0
    %97 = vmatprep.subr.mxu0 0.0
    %98 = vmatpush1.msra.mxu0 0.0
    %99 = vmatprep.subr.mxu0 0.0
    %100 = vmatpush1.msra.mxu0 0.0
    %101 = vmatprep.subr.mxu0 0.0
    %102 = vmatpush1.msra.mxu0 0.0
    %103 = vmatprep.subr.mxu0 0.0
    %104 = vmatpush1.msra.mxu0 0.0
    %105 = vmatprep.subr.mxu0 0.0
    %106 = vmatpush1.msra.mxu0 0.0
    %107 = vmatprep.subr.mxu0 0.0
    %108 = vmatpush1.msra.mxu0 0.0
    %109 = vmatprep.subr.mxu0 0.0
    %110 = vmatpush1.msra.mxu0 0.0
    %111 = vmatprep.subr.mxu0 0.0
    %112 = vmatpush1.msra.mxu0 0.0
    %113 = vmatprep.subr.mxu0 0.0
    %114 = vmatpush1.msra.mxu0 0.0
    %115 = vmatprep.subr.mxu0 0.0
    %116 = vmatpush1.msra.mxu0 0.0
    %117 = vmatprep.subr.mxu0 0.0
    %118 = vmatpush1.msra.mxu0 0.0
    %119 = vmatprep.subr.mxu0 0.0
    %120 = vmatpush1.msra.mxu0 0.0
    %121 = vmatprep.subr.mxu0 0.0
    %122 = vmatpush1.msra.mxu0 0.0
    %123 = vmatprep.subr.mxu0 0.0
    %124 = vmatpush1.msra.mxu0 0.0
    %125 = vmatprep.subr.mxu0 0.0
    %126 = vmatpush1.msra.mxu0 0.0
    %127 = vmatprep.subr.mxu0 0.0
    %128 = vmatpush1.msra.mxu0 0.0
    %129 = vmatprep.subr.mxu0 0.0
    %130 = vmatpush1.msra.mxu0 0.0
    %131 = vmatprep.subr.mxu0 0.0
    %132 = vmatpush1.msra.mxu0 0.0
    %133 = vmatprep.subr.mxu0 0.0
    %134 = vmatpush1.msra.mxu0 0.0
    %135 = vmatprep.subr.mxu0 0.0
    %136 = vmatpush1.msra.mxu0 0.0
    %137 = vmatprep.mubr.f32.mxu0 0.0
    %138 = vmatmul.mubr.f32.gmra.mrb[0].mxu0 %v71
    %v139 = vpop.f32.mrb[0].mxu0
    %v140 = vadd.f32 %v67, %v139
    %v141 = vpop.f32.mrb[0].mxu0
    %142 = vdwg.mxu0
    %v143 = vtanh.pop %v140
    %v144 = vld [vmem:[#allocation7] sm:$0xff]
    %v145 = vld [vmem:[#allocation7 + $0x8] sm:$0xff]
    %v146 = vld [vmem:[#allocation7 + $0x10] sm:$0xff]
    %v147 = vld [vmem:[#allocation7 + $0x18] sm:$0xff]
    %v149 = vsel %vm69, %v143, 0
    %151 = vmatprep.subr.mxu0 0.0
    %152 = vmatpush1.msra.mxu0 %v144
    %153 = vmatprep.subr.mxu0 0.0
    %154 = vmatpush1.msra.mxu0 %v145
    %155 = vmatprep.subr.mxu0 0.0
    %156 = vmatpush1.msra.mxu0 %v146
    %157 = vmatprep.subr.mxu0 0.0
    %158 = vmatpush1.msra.mxu0 %v147
    %159 = vmatprep.subr.mxu0 0.0
    %160 = vmatpush1.msra.mxu0 0.0
    %161 = vmatprep.subr.mxu0 0.0
    %162 = vmatpush1.msra.mxu0 0.0
    %163 = vmatprep.subr.mxu0 0.0
    %164 = vmatpush1.msra.mxu0 0.0
    %165 = vmatprep.subr.mxu0 0.0
    %166 = vmatpush1.msra.mxu0 0.0
    %167 = vmatprep.subr.mxu0 0.0
    %168 = vmatpush1.msra.mxu0 0.0
    %169 = vmatprep.subr.mxu0 0.0
    %170 = vmatpush1.msra.mxu0 0.0
    %171 = vmatprep.subr.mxu0 0.0
    %172 = vmatpush1.msra.mxu0 0.0
    %173 = vmatprep.subr.mxu0 0.0
    %174 = vmatpush1.msra.mxu0 0.0
    %175 = vmatprep.subr.mxu0 0.0
    %176 = vmatpush1.msra.mxu0 0.0
    %177 = vmatprep.subr.mxu0 0.0
    %178 = vmatpush1.msra.mxu0 0.0
    %179 = vmatprep.subr.mxu0 0.0
    %180 = vmatpush1.msra.mxu0 0.0
    %181 = vmatprep.subr.mxu0 0.0
    %182 = vmatpush1.msra.mxu0 0.0
    %183 = vmatprep.subr.mxu0 0.0
    %184 = vmatpush1.msra.mxu0 0.0
    %185 = vmatprep.subr.mxu0 0.0
    %186 = vmatpush1.msra.mxu0 0.0
    %187 = vmatprep.subr.mxu0 0.0
    %188 = vmatpush1.msra.mxu0 0.0
    %189 = vmatprep.subr.mxu0 0.0
    %190 = vmatpush1.msra.mxu0 0.0
    %191 = vmatprep.subr.mxu0 0.0
    %192 = vmatpush1.msra.mxu0 0.0
    %193 = vmatprep.subr.mxu0 0.0
    %194 = vmatpush1.msra.mxu0 0.0
    %195 = vmatprep.subr.mxu0 0.0
    %196 = vmatpush1.msra.mxu0 0.0
    %197 = vmatprep.subr.mxu0 0.0
    %198 = vmatpush1.msra.mxu0 0.0
    %199 = vmatprep.subr.mxu0 0.0
    %200 = vmatpush1.msra.mxu0 0.0
    %201 = vmatprep.subr.mxu0 0.0
    %202 = vmatpush1.msra.mxu0 0.0
    %203 = vmatprep.subr.mxu0 0.0
    %204 = vmatpush1.msra.mxu0 0.0
    %205 = vmatprep.subr.mxu0 0.0
    %206 = vmatpush1.msra.mxu0 0.0
    %207 = vmatprep.subr.mxu0 0.0
    %208 = vmatpush1.msra.mxu0 0.0
    %209 = vmatprep.subr.mxu0 0.0
    %210 = vmatpush1.msra.mxu0 0.0
    %211 = vmatprep.subr.mxu0 0.0
    %212 = vmatpush1.msra.mxu0 0.0
    %213 = vmatprep.subr.mxu0 0.0
    %214 = vmatpush1.msra.mxu0 0.0
    %215 = vmatprep.mubr.f32.mxu0 0.0
    %216 = vmatmul.mubr.f32.gmra.mrb[0].mxu0 %v149
    %v217 = vpop.f32.mrb[0].mxu0
    %v218 = vadd.f32 0.0, %v217
    %v219 = vpop.f32.mrb[0].mxu0
    %220 = vdwg.mxu0
    %221 = vst [vmem:[#allocation8] sm:$0xff] %v218
    // Predicated region
    $region30: #{tpu_custom_call.1} parent=1 // pred_check
      _
    $region31: #{tpu_custom_call.1} parent=1 // pred_check_branch
      %223 = sbr.rel (0) target = $region33
    $region32: #{tpu_custom_call.1} parent=1 // pred_region
      %s225 = ssub.s32 128, 128
      %226 = vsyncadd [#allocation4], %s225
      %s228 = sshll.u32 [#allocation8], 4
      %s229 = int_to_ptr.vmem [resolvable:$true] %s228
      %231 = dma.vmem_to_hbm [thread:$0]  %s229, 128, %s4, [#allocation4]
    $region33: #{tpu_custom_call.1} parent=1 // pred_fallthru
      _
    // Predicated region
    $region34: #{tpu_custom_call.1} parent=1 // pred_check
      _
    $region35: #{tpu_custom_call.1} parent=1 // pred_check_branch
      %233 = sbr.rel (0) target = $region37
    $region36: #{tpu_custom_call.1} parent=1 // pred_region
      %234 = dma.done [#allocation4], 128
    $region37: #{tpu_custom_call.1} parent=1 // pred_fallthru
      _
    %235 = vsyncpa [#allocation3], 1
    %236 = vsyncpa [#allocation6], 1
    %237 = vsyncpa [#allocation4], 1

</llo_original>
